<compile_context>
chip_gen: v7x
topology: tpu7x:2x2x1
jax: 0.10.0
libtpu: 0.0.40
codegen_flags: <defaults>
</compile_context>

<pallas_src>
import jax
import jax.numpy as jnp
from jax.experimental import pallas as pl
from jax.experimental.pallas import tpu as pltpu

BN_EPS = 1e-5
LANE = 128
SUBLANE_BF16 = 16          # bf16 packs 16 rows per native (16, 128) tile


def _round_up(x, m):
    return ((x + m - 1) // m) * m


def _pad2d(a, rows, cols):
    r, c = a.shape
    return jnp.pad(a, ((0, rows - r), (0, cols - c)))


def _nbytes(shape, dtype):
    n = 1
    for d in shape:
        n *= d
    return n * jnp.dtype(dtype).itemsize


# ----------------------------------------------------------------------------
# Shared classifier-head epilogue (BN + embed biases already folded into b1):
#   h = relu(ve @ W1v + (le @ W1l) + b1);   o = h @ W2 + b2
# ----------------------------------------------------------------------------
def _head(ve_f32, le_h_f32, w1v_ref, b1_ref, w2_ref, b2_ref):
    h = (jnp.dot(ve_f32.astype(jnp.bfloat16), w1v_ref[...],
                 preferred_element_type=jnp.float32)
         + le_h_f32 + b1_ref[...])
    h = jnp.maximum(h, 0.0)            # ReLU (classifier_params['act'] = 'ReLU')
    return (jnp.dot(h.astype(jnp.bfloat16), w2_ref[...],
                    preferred_element_type=jnp.float32) + b2_ref[...])


# ---- Fast path: whole problem in VMEM, no grid / scratch / pl.when ----------
def _fused_single_kernel(img_ref, wv_ref, txt_ref, wl_ref,
                         w1v_ref, w1l_ref, b1_ref, w2_ref, b2_ref, o_ref):
    ve = jnp.dot(img_ref[...], wv_ref[...], preferred_element_type=jnp.float32)
    le = jnp.dot(txt_ref[...], wl_ref[...], preferred_element_type=jnp.float32)
    le_h = jnp.dot(le.astype(jnp.bfloat16), w1l_ref[...],
                   preferred_element_type=jnp.float32)
    o_ref[...] = _head(ve, le_h, w1v_ref, b1_ref, w2_ref, b2_ref)


# ---- Large-K path: vision contraction tiled/pipelined over a 1-D grid -------
def _fused_tiled_kernel(img_ref, wv_ref, txt_ref, wl_ref,
                        w1v_ref, w1l_ref, b1_ref, w2_ref, b2_ref,
                        o_ref, acc_ref, leh_ref):
    k = pl.program_id(0)

    @pl.when(k == 0)
    def _():
        acc_ref[...] = jnp.zeros_like(acc_ref)
        # Language path hoisted to step 0: its MXU work hides behind the
        # in-flight vision-tile DMAs instead of sitting in the epilogue.
        le = jnp.dot(txt_ref[...], wl_ref[...], preferred_element_type=jnp.float32)
        leh_ref[...] = jnp.dot(le.astype(jnp.bfloat16), w1l_ref[...],
                               preferred_element_type=jnp.float32)

    # Vision embedding, streamed over the contraction dim (bf16 MXU, f32 acc).
    acc_ref[...] += jnp.dot(img_ref[...], wv_ref[...],
                            preferred_element_type=jnp.float32)

    @pl.when(k == pl.num_programs(0) - 1)
    def _():
        o_ref[...] = _head(acc_ref[...], leh_ref[...], w1v_ref, b1_ref,
                           w2_ref, b2_ref)


def _fused_call(img_p, txt_p, prep):
    Bp, Kp = img_p.shape
    Tp = txt_p.shape[1]
    VISp = prep["wv"].shape[1]
    LANp = prep["wl"].shape[1]
    FC1p = prep["w1v"].shape[1]
    FC2p = prep["w2"].shape[1]
    tk = prep["tk"]

    args = (img_p, prep["wv"], txt_p, prep["wl"],
            prep["w1v"], prep["w1l"], prep["b1"], prep["w2"], prep["b2"])
    out_shape = jax.ShapeDtypeStruct((Bp, FC2p), jnp.float32)

    # Constant (grid-invariant) operand + output footprint, for the VMEM limit.
    const_bytes = (_nbytes((Bp, Tp), jnp.bfloat16)
                   + _nbytes((Tp, LANp), jnp.bfloat16)
                   + _nbytes((VISp, FC1p), jnp.bfloat16)
                   + _nbytes((LANp, FC1p), jnp.bfloat16)
                   + _nbytes((1, FC1p), jnp.float32)
                   + _nbytes((FC1p, FC2p), jnp.bfloat16)
                   + _nbytes((1, FC2p), jnp.float32)
                   + _nbytes((Bp, FC2p), jnp.float32))

    if Kp <= tk:
        # Collapsed grid: single step, everything resident in VMEM.
        vlim = 2 * (const_bytes
                    + _nbytes((Bp, Kp), jnp.bfloat16)
                    + _nbytes((Kp, VISp), jnp.bfloat16)) + (2 << 20)
        return pl.pallas_call(
            _fused_single_kernel,
            out_shape=out_shape,
            compiler_params=pltpu.CompilerParams(
                vmem_limit_bytes=int(min(max(vlim, 4 << 20), 32 << 20))),
        )(*args)

    num_k = Kp // tk

    def full(shape):
        # Grid-invariant block.  TODO(synk): mark with pipeline_mode=
        # pl.Buffered(1) to drop the redundant double buffer (footprint is
        # tiny here, so left at the default for maximum portability).
        return pl.BlockSpec(shape, lambda k: (0, 0))

    vlim = (2 * (const_bytes
                 + _nbytes((Bp, tk), jnp.bfloat16)
                 + _nbytes((tk, VISp), jnp.bfloat16))
            + _nbytes((Bp, VISp), jnp.float32)
            + _nbytes((Bp, FC1p), jnp.float32) + (2 << 20))

    return pl.pallas_call(
        _fused_tiled_kernel,
        out_shape=out_shape,
        grid_spec=pltpu.PrefetchScalarGridSpec(
            num_scalar_prefetch=0,
            grid=(num_k,),
            in_specs=[
                pl.BlockSpec((Bp, tk), lambda k: (0, k)),     # img K-tile
                pl.BlockSpec((tk, VISp), lambda k: (k, 0)),   # Wv K-tile
                full((Bp, Tp)),                               # txt
                full((Tp, LANp)),                             # Wl
                full((VISp, FC1p)),                           # W1 (vision rows)
                full((LANp, FC1p)),                           # W1 (language rows)
                full((1, FC1p)),                              # b1 (BN+bias folded)
                full((FC1p, FC2p)),                           # W2
                full((1, FC2p)),                              # b2
            ],
            out_specs=pl.BlockSpec((Bp, FC2p), lambda k: (0, 0)),
            scratch_shapes=[pltpu.VMEM((Bp, VISp), jnp.float32),   # ve accumulator
                            pltpu.VMEM((Bp, FC1p), jnp.float32)],  # le @ W1l
        ),
        compiler_params=pltpu.CompilerParams(
            dimension_semantics=("arbitrary",),
            vmem_limit_bytes=int(min(max(vlim, 4 << 20), 32 << 20)),
        ),
    )(*args)


# ----------------------------------------------------------------------------
# Parameter prep: fold BN + embedder biases, split W1, pad to TPU tiles, bf16.
# ----------------------------------------------------------------------------
def prepare_params(raw, *, vis_dim, lang_dim, fc_size, batch, tk=2048):
    fc0, fc1, fc2 = fc_size
    assert fc0 == vis_dim + lang_dim
    K = raw["wv"].shape[0]
    T = raw["wl"].shape[0]

    Bp = _round_up(max(batch, SUBLANE_BF16), SUBLANE_BF16)
    Kp = _round_up(K, LANE) if K <= tk else _round_up(K, tk)
    Tp = _round_up(T, LANE)
    VISp = _round_up(vis_dim, LANE)
    LANp = _round_up(lang_dim, LANE)
    FC1p = _round_up(fc1, LANE)
    FC2p = _round_up(fc2, LANE)

    # Fold inference BatchNorm1d into W1/b1:
    #   xn = (x - mean) * scale + beta,  scale = gamma / sqrt(var + eps)
    #   xn @ W1 + b1 = x @ (diag(scale) @ W1) + (beta - mean*scale) @ W1 + b1
    scale = raw["bn_gamma"] / jnp.sqrt(raw["bn_var"] + BN_EPS)
    shift = raw["bn_beta"] - raw["bn_mean"] * scale
    w1_eff = raw["w1"] * scale[:, None]
    w1v = w1_eff[:vis_dim]
    w1l = w1_eff[vis_dim:]
    # Fold the embedder biases (bv, bl) through W1 as well.
    b1_total = (raw["b1"] + shift @ raw["w1"]
                + raw["bv"] @ w1v + raw["bl"] @ w1l)

    return {
        "tk": tk, "Bp": Bp, "K": K, "Kp": Kp, "T": T, "Tp": Tp, "fc2": fc2,
        "wv": _pad2d(raw["wv"], Kp, VISp).astype(jnp.bfloat16),
        "wl": _pad2d(raw["wl"], Tp, LANp).astype(jnp.bfloat16),
        "w1v": _pad2d(w1v, VISp, FC1p).astype(jnp.bfloat16),
        "w1l": _pad2d(w1l, LANp, FC1p).astype(jnp.bfloat16),
        "b1": _pad2d(b1_total[None, :], 1, FC1p).astype(jnp.float32),
        "w2": _pad2d(raw["w2"], FC1p, FC2p).astype(jnp.bfloat16),
        "b2": _pad2d(raw["b2"][None, :], 1, FC2p).astype(jnp.float32),
    }


def _pad_inputs(prep, img_x, txt_x):
    B = img_x.shape[0]
    img = img_x.reshape(B, -1).astype(jnp.bfloat16)
    txt = txt_x.astype(jnp.bfloat16)
    img_p = jnp.pad(img, ((0, prep["Bp"] - B), (0, prep["Kp"] - prep["K"])))
    txt_p = jnp.pad(txt, ((0, prep["Bp"] - B), (0, prep["Tp"] - prep["T"])))
    return img_p, txt_p


# Full forward, mirroring Model.forward
def model_forward(prep, img_x, txt_x):
    B = img_x.shape[0]
    img_p, txt_p = _pad_inputs(prep, img_x, txt_x)
    out_p = _fused_call(img_p, txt_p, prep)
    return out_p[:B, :prep["fc2"]]


# ----------------------------------------------------------------------------
# Raw (PyTorch-equivalent) parameter init
# ----------------------------------------------------------------------------
def init_raw_params(key, img_feat, txt_feat, vis_dim, lang_dim, fc_size):
    ks = jax.random.split(key, 6)
    fc0, fc1, fc2 = fc_size
    assert fc0 == vis_dim + lang_dim
    return {
        "wv": jax.random.normal(ks[0], (img_feat, vis_dim), jnp.float32) * 0.02,
        "bv": jnp.zeros((vis_dim,), jnp.float32),
        "wl": jax.random.normal(ks[1], (txt_feat, lang_dim), jnp.float32) * 0.02,
        "bl": jnp.zeros((lang_dim,), jnp.float32),
        # BatchNorm1d(fc0) fresh init (inference mode)
        "bn_gamma": jnp.ones((fc0,), jnp.float32),
        "bn_beta": jnp.zeros((fc0,), jnp.float32),
        "bn_mean": jnp.zeros((fc0,), jnp.float32),
        "bn_var": jnp.ones((fc0,), jnp.float32),
        # Linear(fc0, fc1), Linear(fc1, fc2)
        "w1": jax.random.normal(ks[2], (fc0, fc1), jnp.float32) * (1.0 / fc0 ** 0.5),
        "b1": jax.random.normal(ks[3], (fc1,), jnp.float32) * 0.01,
        "w2": jax.random.normal(ks[4], (fc1, fc2), jnp.float32) * (1.0 / fc1 ** 0.5),
        "b2": jax.random.normal(ks[5], (fc2,), jnp.float32) * 0.01,
    }


# ----------------------------------------------------------------------------
# References
# ----------------------------------------------------------------------------
def ref_mirrored(prep, img_x, txt_x):
    """Structural mirror of the kernel math (bf16 operands, folded BN/bias)."""
    B = img_x.shape[0]
    img_p, txt_p = _pad_inputs(prep, img_x, txt_x)
    f32 = jnp.float32
    bf = lambda a: a.astype(jnp.bfloat16).astype(f32)
    ve = img_p.astype(f32) @ prep["wv"].astype(f32)
    le = txt_p.astype(f32) @ prep["wl"].astype(f32)
    h = (bf(ve) @ prep["w1v"].astype(f32)
         + bf(le) @ prep["w1l"].astype(f32) + prep["b1"])
    h = jnp.maximum(h, 0.0)
    o = bf(h) @ prep["w2"].astype(f32) + prep["b2"]
    return o[:B, :prep["fc2"]]


def ref_f32(p, img, txt):
    """Pure-f32 PyTorch-semantics reference (loose tolerance vs bf16 kernel)."""
    B = img.shape[0]
    ve = img.reshape(B, -1) @ p["wv"] + p["bv"]
    le = txt @ p["wl"] + p["bl"]
    x = jnp.concatenate([ve, le], axis=1)
    xn = ((x - p["bn_mean"]) / jnp.sqrt(p["bn_var"] + BN_EPS)
          * p["bn_gamma"] + p["bn_beta"])
    h = jnp.maximum(xn @ p["w1"] + p["b1"], 0.0)
    return h @ p["w2"] + p["b2"]


if __name__ == "__main__":
    key = jax.random.PRNGKey(0)
    k_img, k_txt, k_param, k_img2, k_txt2, k_param2 = jax.random.split(key, 6)

    # ---------------- Demo config (single-step collapsed-grid path) ---------
    B, C, H, W = 2, 4, 16, 16          # image input, NCHW → K = 1024
    T = 16                             # language feature dim
    VIS_DIM, LANG_DIM = 32, 32         # embedder output dims
    FC_SIZE = [VIS_DIM + LANG_DIM, 32, 8]

    img_x = jax.random.normal(k_img, (B, C, H, W), jnp.float32)
    txt_x = jax.random.normal(k_txt, (B, T), jnp.float32)

    raw = init_raw_params(k_param, C * H * W, T, VIS_DIM, LANG_DIM, FC_SIZE)
    prep = prepare_params(raw, vis_dim=VIS_DIM, lang_dim=LANG_DIM,
                          fc_size=FC_SIZE, batch=B)

    out = model_forward(prep, img_x, txt_x)
    out = jax.block_until_ready(out)
    assert out.shape == (B, FC_SIZE[-1]), out.shape
    assert bool(jnp.all(jnp.isfinite(out)))

    mir = ref_mirrored(prep, img_x, txt_x)
    assert bool(jnp.allclose(out, mir, atol=1e-4, rtol=1e-4)), (
        float(jnp.max(jnp.abs(out - mir))))

    f32r = ref_f32(raw, img_x, txt_x)
    assert bool(jnp.allclose(out, f32r, atol=5e-2, rtol=5e-2)), (
        float(jnp.max(jnp.abs(out - f32r))))

    # ----------- Large-K config: exercises the K-tiled pipelined path -------
    B2, C2, H2, W2 = 2, 8, 32, 32      # K = 8192 > tk = 2048 → 4 grid steps
    img2 = jax.random.normal(k_img2, (B2, C2, H2, W2), jnp.float32)
    txt2 = jax.random.normal(k_txt2, (B2, T), jnp.float32)
    raw2 = init_raw_params(k_param2, C2 * H2 * W2, T, VIS_DIM, LANG_DIM, FC_SIZE)
    prep2 = prepare_params(raw2, vis_dim=VIS_DIM, lang_dim=LANG_DIM,
                           fc_size=FC_SIZE, batch=B2, tk=2048)

    out2 = jax.block_until_ready(model_forward(prep2, img2, txt2))
    assert out2.shape == (B2, FC_SIZE[-1]), out2.shape
    assert bool(jnp.all(jnp.isfinite(out2)))
    mir2 = ref_mirrored(prep2, img2, txt2)
    assert bool(jnp.allclose(out2, mir2, atol=1e-2, rtol=1e-2)), (
        float(jnp.max(jnp.abs(out2 - mir2))))

    print("KERNEL_OK")
</pallas_src>

<mosaic_0001>
module attributes {stable_mosaic.version = 11 : i64} {
  func.func @_fused_single_kernel(%arg0: memref<16x1024xbf16, #tpu.memory_space<vmem>>, %arg1: memref<1024x128xbf16, #tpu.memory_space<vmem>>, %arg2: memref<16x128xbf16, #tpu.memory_space<vmem>>, %arg3: memref<128x128xbf16, #tpu.memory_space<vmem>>, %arg4: memref<128x128xbf16, #tpu.memory_space<vmem>>, %arg5: memref<128x128xbf16, #tpu.memory_space<vmem>>, %arg6: memref<1x128xf32, #tpu.memory_space<vmem>>, %arg7: memref<128x128xbf16, #tpu.memory_space<vmem>>, %arg8: memref<1x128xf32, #tpu.memory_space<vmem>>, %arg9: memref<16x128xf32, #tpu.memory_space<vmem>>) attributes {dimension_semantics = [], scalar_prefetch = 0 : i64, scratch_operands = 0 : i64, tpu.core_type = #tpu.core_type<tc>} {
    %c0 = arith.constant 0 : index
    %c0_0 = arith.constant 0 : index
    %0 = vector.load %arg0[%c0, %c0_0] : memref<16x1024xbf16, #tpu.memory_space<vmem>>, vector<16x1024xbf16>
    %c0_1 = arith.constant 0 : index
    %c0_2 = arith.constant 0 : index
    %1 = vector.load %arg1[%c0_1, %c0_2] : memref<1024x128xbf16, #tpu.memory_space<vmem>>, vector<1024x128xbf16>
    %cst = arith.constant dense<0.000000e+00> : vector<16x128xf32>
    %2 = tpu.matmul %0, %1, %cst {dimension_numbers = #tpu.dot_dimension_numbers<[1], [0], [0], [1], [0, 0, 1, 1], [], []>} : vector<16x1024xbf16>, vector<1024x128xbf16>, vector<16x128xf32> -> vector<16x128xf32>
    %c0_3 = arith.constant 0 : index
    %c0_4 = arith.constant 0 : index
    %3 = vector.load %arg2[%c0_3, %c0_4] : memref<16x128xbf16, #tpu.memory_space<vmem>>, vector<16x128xbf16>
    %c0_5 = arith.constant 0 : index
    %c0_6 = arith.constant 0 : index
    %4 = vector.load %arg3[%c0_5, %c0_6] : memref<128x128xbf16, #tpu.memory_space<vmem>>, vector<128x128xbf16>
    %cst_7 = arith.constant dense<0.000000e+00> : vector<16x128xf32>
    %5 = tpu.matmul %3, %4, %cst_7 {dimension_numbers = #tpu.dot_dimension_numbers<[1], [0], [0], [1], [0, 0, 1, 1], [], []>} : vector<16x128xbf16>, vector<128x128xbf16>, vector<16x128xf32> -> vector<16x128xf32>
    %6 = arith.truncf %5 : vector<16x128xf32> to vector<16x128xbf16>
    %c0_8 = arith.constant 0 : index
    %c0_9 = arith.constant 0 : index
    %7 = vector.load %arg5[%c0_8, %c0_9] : memref<128x128xbf16, #tpu.memory_space<vmem>>, vector<128x128xbf16>
    %cst_10 = arith.constant dense<0.000000e+00> : vector<16x128xf32>
    %8 = tpu.matmul %6, %7, %cst_10 {dimension_numbers = #tpu.dot_dimension_numbers<[1], [0], [0], [1], [0, 0, 1, 1], [], []>} : vector<16x128xbf16>, vector<128x128xbf16>, vector<16x128xf32> -> vector<16x128xf32>
    %9 = arith.truncf %2 : vector<16x128xf32> to vector<16x128xbf16>
    %c0_11 = arith.constant 0 : index
    %c0_12 = arith.constant 0 : index
    %10 = vector.load %arg4[%c0_11, %c0_12] : memref<128x128xbf16, #tpu.memory_space<vmem>>, vector<128x128xbf16>
    %cst_13 = arith.constant dense<0.000000e+00> : vector<16x128xf32>
    %11 = tpu.matmul %9, %10, %cst_13 {dimension_numbers = #tpu.dot_dimension_numbers<[1], [0], [0], [1], [0, 0, 1, 1], [], []>} : vector<16x128xbf16>, vector<128x128xbf16>, vector<16x128xf32> -> vector<16x128xf32>
    %12 = arith.addf %11, %8 : vector<16x128xf32>
    %c0_14 = arith.constant 0 : index
    %c0_15 = arith.constant 0 : index
    %13 = vector.load %arg6[%c0_14, %c0_15] : memref<1x128xf32, #tpu.memory_space<vmem>>, vector<1x128xf32>
    %14 = vector.broadcast %13 : vector<1x128xf32> to vector<16x128xf32>
    %15 = arith.addf %12, %14 : vector<16x128xf32>
    %cst_16 = arith.constant 0.000000e+00 : f32
    %16 = vector.broadcast %cst_16 : f32 to vector<16x128xf32>
    %17 = arith.maximumf %15, %16 : vector<16x128xf32>
    %18 = arith.truncf %17 : vector<16x128xf32> to vector<16x128xbf16>
    %c0_17 = arith.constant 0 : index
    %c0_18 = arith.constant 0 : index
    %19 = vector.load %arg7[%c0_17, %c0_18] : memref<128x128xbf16, #tpu.memory_space<vmem>>, vector<128x128xbf16>
    %cst_19 = arith.constant dense<0.000000e+00> : vector<16x128xf32>
    %20 = tpu.matmul %18, %19, %cst_19 {dimension_numbers = #tpu.dot_dimension_numbers<[1], [0], [0], [1], [0, 0, 1, 1], [], []>} : vector<16x128xbf16>, vector<128x128xbf16>, vector<16x128xf32> -> vector<16x128xf32>
    %c0_20 = arith.constant 0 : index
    %c0_21 = arith.constant 0 : index
    %21 = vector.load %arg8[%c0_20, %c0_21] : memref<1x128xf32, #tpu.memory_space<vmem>>, vector<1x128xf32>
    %22 = vector.broadcast %21 : vector<1x128xf32> to vector<16x128xf32>
    %23 = arith.addf %20, %22 : vector<16x128xf32>
    %c0_22 = arith.constant 0 : index
    %c0_23 = arith.constant 0 : index
    %24 = vector.load %arg9[%c0_22, %c0_23] : memref<16x128xf32, #tpu.memory_space<vmem>>, vector<16x128xf32>
    tpu.vector_store %arg9[%c0_22, %c0_23], %23 {strides = array<i32>} : memref<16x128xf32, #tpu.memory_space<vmem>>, vector<16x128xf32>,
    return
  }
}

</mosaic_0001>

<llo_original>
// kernel: tpu_custom_call.1
$region0: #{tpu_custom_call.1}
  #allocation0 [shape = 'u32[]', space=smem, size = 0x4, offset = 0x4, fixed_abs, tag = 'smem constant byte address 0x4 - core index']
  #allocation1 [shape = 'u32[144,128]{1,0:T(1,128)}', space=vmem, size = 0x12000, scoped, tag = 'internal scratch']
  %s0 = inlined_call_operand.hbm [shape: bf16[16,1024], index: 0, kind: input, shape index: {}]
  %s1 = inlined_call_operand.hbm [shape: bf16[1024,128], index: 1, kind: input, shape index: {}]
  %s2 = inlined_call_operand.hbm [shape: bf16[16,128], index: 2, kind: input, shape index: {}]
  %s3 = inlined_call_operand.hbm [shape: bf16[128,128], index: 3, kind: input, shape index: {}]
  %s4 = inlined_call_operand.hbm [shape: bf16[128,128], index: 4, kind: input, shape index: {}]
  %s5 = inlined_call_operand.hbm [shape: bf16[128,128], index: 5, kind: input, shape index: {}]
  %s6 = inlined_call_operand.vmem [shape: f32[1,128], index: 6, kind: input, shape index: {}]
  %s7 = inlined_call_operand.hbm [shape: bf16[128,128], index: 7, kind: input, shape index: {}]
  %s8 = inlined_call_operand.vmem [shape: f32[1,128], index: 8, kind: input, shape index: {}]
  %s9 = inlined_call_operand.hbm [shape: f32[16,128], index: 9, kind: output, shape index: {}]
  %s10 = sld [smem:[#allocation0]]
  $region74: #{tpu_custom_call.1} parent=0
    _
  %s12 = ssub.s32 1, %s10
  %s13 = scalar_select 0, %s12, %s10
  $region1: #{tpu_custom_call.1} parent=0
    #allocation2 [shape = 'u8[32768]{0}', space=vmem, size = 0x8000, scoped, tag = 'input window, operand 0, single buffered']
    #allocation3 [shape = 's32[1]{0}', space=sflag, size = 0x4, scoped, tag = 'scoped memory for tpu_custom_call.1']
    #allocation4 [shape = 's32[1]{0}', space=sflag, size = 0x4, scoped, tag = 'scoped memory for tpu_custom_call.1']
    #allocation5 [shape = 'u8[262144]{0}', space=vmem, size = 0x40000, scoped, tag = 'input window, operand 1, single buffered']
    #allocation6 [shape = 's32[1]{0}', space=sflag, size = 0x4, scoped, tag = 'scoped memory for tpu_custom_call.1']
    #allocation7 [shape = 'u8[4096]{0}', space=vmem, size = 0x1000, scoped, tag = 'input window, operand 2, single buffered']
    #allocation8 [shape = 'u8[32768]{0}', space=vmem, size = 0x8000, scoped, tag = 'input window, operand 3, single buffered']
    #allocation9 [shape = 's32[1]{0}', space=sflag, size = 0x4, scoped, tag = 'scoped memory for tpu_custom_call.1']
    #allocation10 [shape = 'u8[32768]{0}', space=vmem, size = 0x8000, scoped, tag = 'input window, operand 4, single buffered']
    #allocation11 [shape = 'u8[32768]{0}', space=vmem, size = 0x8000, scoped, tag = 'input window, operand 5, single buffered']
    #allocation12 [shape = 's32[1]{0}', space=sflag, size = 0x4, scoped, tag = 'scoped memory for tpu_custom_call.1']
    #allocation13 [shape = 'u8[32768]{0}', space=vmem, size = 0x8000, scoped, tag = 'input window, operand 7, single buffered']
    #allocation14 [shape = 'u8[8192]{0}', space=vmem, size = 0x2000, scoped, tag = 'output window, operand 0, single buffered']
    %14 = vsyncpa [#allocation3], 0
    %15 = vsyncpa [#allocation6], 0
    %16 = vsyncpa [#allocation9], 0
    %17 = vsyncpa [#allocation12], 0
    %18 = vsyncpa [#allocation4], 0
    // Predicated region
    $region2: #{tpu_custom_call.1} parent=1 // pred_check
      _
    $region3: #{tpu_custom_call.1} parent=1 // pred_check_branch
      %20 = sbr.rel (0) target = $region5
    $region4: #{tpu_custom_call.1} parent=1 // pred_region
      %s22 = ssub.s32 1024, 1024
      %23 = vsyncadd [#allocation3], %s22
      %s24 = sshll.u32 [#allocation2], 4
      %s25 = int_to_ptr.vmem [resolvable:$true] %s24
      %30 = dma.hbm_to_vmem [thread:$0]  %s0, 1024, %s25, [#allocation3], 512, 512, 32
    $region5: #{tpu_custom_call.1} parent=1 // pred_fallthru
      _
    // Predicated region
    $region6: #{tpu_custom_call.1} parent=1 // pred_check
      _
    $region7: #{tpu_custom_call.1} parent=1 // pred_check_branch
      %32 = sbr.rel (0) target = $region9
    $region8: #{tpu_custom_call.1} parent=1 // pred_region
      %s34 = ssub.s32 8192, 8192
      %35 = vsyncadd [#allocation6], %s34
      %s36 = sshll.u32 [#allocation5], 4
      %s37 = int_to_ptr.vmem [resolvable:$true] %s36
      %42 = dma.hbm_to_vmem [thread:$0]  %s1, 8192, %s37, [#allocation6], 64, 64, 4
    $region9: #{tpu_custom_call.1} parent=1 // pred_fallthru
      _
    // Predicated region
    $region10: #{tpu_custom_call.1} parent=1 // pred_check
      _
    $region11: #{tpu_custom_call.1} parent=1 // pred_check_branch
      %44 = sbr.rel (0) target = $region13
    $region12: #{tpu_custom_call.1} parent=1 // pred_region
      %s46 = ssub.s32 128, 128
      %47 = vsyncadd [#allocation6], %s46
      %s48 = sshll.u32 [#allocation7], 4
      %s49 = int_to_ptr.vmem [resolvable:$true] %s48
      %54 = dma.hbm_to_vmem [thread:$0]  %s2, 128, %s49, [#allocation6], 64, 64, 4
    $region13: #{tpu_custom_call.1} parent=1 // pred_fallthru
      _
    // Predicated region
    $region14: #{tpu_custom_call.1} parent=1 // pred_check
      _
    $region15: #{tpu_custom_call.1} parent=1 // pred_check_branch
      %56 = sbr.rel (0) target = $region17
    $region16: #{tpu_custom_call.1} parent=1 // pred_region
      %s58 = ssub.s32 1024, 1024
      %59 = vsyncadd [#allocation9], %s58
      %s60 = sshll.u32 [#allocation8], 4
      %s61 = int_to_ptr.vmem [resolvable:$true] %s60
      %66 = dma.hbm_to_vmem [thread:$0]  %s3, 1024, %s61, [#allocation9], 64, 64, 4
    $region17: #{tpu_custom_call.1} parent=1 // pred_fallthru
      _
    // Predicated region
    $region18: #{tpu_custom_call.1} parent=1 // pred_check
      _
    $region19: #{tpu_custom_call.1} parent=1 // pred_check_branch
      %68 = sbr.rel (0) target = $region21
    $region20: #{tpu_custom_call.1} parent=1 // pred_region
      %s70 = ssub.s32 1024, 1024
      %71 = vsyncadd [#allocation9], %s70
      %s72 = sshll.u32 [#allocation10], 4
      %s73 = int_to_ptr.vmem [resolvable:$true] %s72
      %78 = dma.hbm_to_vmem [thread:$0]  %s4, 1024, %s73, [#allocation9], 64, 64, 4
    $region21: #{tpu_custom_call.1} parent=1 // pred_fallthru
      _
    // Predicated region
    $region22: #{tpu_custom_call.1} parent=1 // pred_check
      _
    $region23: #{tpu_custom_call.1} parent=1 // pred_check_branch
      %80 = sbr.rel (0) target = $region25
    $region24: #{tpu_custom_call.1} parent=1 // pred_region
      %s82 = ssub.s32 1024, 1024
      %83 = vsyncadd [#allocation12], %s82
      %s84 = sshll.u32 [#allocation11], 4
      %s85 = int_to_ptr.vmem [resolvable:$true] %s84
      %90 = dma.hbm_to_vmem [thread:$0]  %s5, 1024, %s85, [#allocation12], 64, 64, 4
    $region25: #{tpu_custom_call.1} parent=1 // pred_fallthru
      _
    // Predicated region
    $region26: #{tpu_custom_call.1} parent=1 // pred_check
      _
    $region27: #{tpu_custom_call.1} parent=1 // pred_check_branch
      %92 = sbr.rel (0) target = $region29
    $region28: #{tpu_custom_call.1} parent=1 // pred_region
      _
    $region29: #{tpu_custom_call.1} parent=1 // pred_fallthru
      _
    // Predicated region
    $region30: #{tpu_custom_call.1} parent=1 // pred_check
      _
    $region31: #{tpu_custom_call.1} parent=1 // pred_check_branch
      %94 = sbr.rel (0) target = $region33
    $region32: #{tpu_custom_call.1} parent=1 // pred_region
      %s96 = ssub.s32 1024, 1024
      %97 = vsyncadd [#allocation12], %s96
      %s98 = sshll.u32 [#allocation13], 4
      %s99 = int_to_ptr.vmem [resolvable:$true] %s98
      %104 = dma.hbm_to_vmem [thread:$0]  %s7, 1024, %s99, [#allocation12], 64, 64, 4
    $region33: #{tpu_custom_call.1} parent=1 // pred_fallthru
      _
    // Predicated region
    $region34: #{tpu_custom_call.1} parent=1 // pred_check
      _
    $region35: #{tpu_custom_call.1} parent=1 // pred_check_branch
      %106 = sbr.rel (0) target = $region37
    $region36: #{tpu_custom_call.1} parent=1 // pred_region
      _
    $region37: #{tpu_custom_call.1} parent=1 // pred_fallthru
      _
    // Predicated region
    $region38: #{tpu_custom_call.1} parent=1 // pred_check
      _
    $region39: #{tpu_custom_call.1} parent=1 // pred_check_branch
      %108 = sbr.rel (0) target = $region41
    $region40: #{tpu_custom_call.1} parent=1 // pred_region
      %109 = dma.done [#allocation3], 1024
    $region41: #{tpu_custom_call.1} parent=1 // pred_fallthru
      _
    // Predicated region
    $region42: #{tpu_custom_call.1} parent=1 // pred_check
      _
    $region43: #{tpu_custom_call.1} parent=1 // pred_check_branch
      %111 = sbr.rel (0) target = $region45
    $region44: #{tpu_custom_call.1} parent=1 // pred_region
      %112 = dma.done [#allocation6], 8192
    $region45: #{tpu_custom_call.1} parent=1 // pred_fallthru
      _
    // Predicated region
    $region46: #{tpu_custom_call.1} parent=1 // pred_check
      _
    $region47: #{tpu_custom_call.1} parent=1 // pred_check_branch
      %114 = sbr.rel (0) target = $region49
    $region48: #{tpu_custom_call.1} parent=1 // pred_region
      %115 = dma.done [#allocation6], 128
    $region49: #{tpu_custom_call.1} parent=1 // pred_fallthru
      _
    // Predicated region
    $region50: #{tpu_custom_call.1} parent=1 // pred_check
      _
    $region51: #{tpu_custom_call.1} parent=1 // pred_check_branch
      %117 = sbr.rel (0) target = $region53
    $region52: #{tpu_custom_call.1} parent=1 // pred_region
      %118 = dma.done [#allocation9], 1024
    $region53: #{tpu_custom_call.1} parent=1 // pred_fallthru
      _
    // Predicated region
    $region54: #{tpu_custom_call.1} parent=1 // pred_check
      _
    $region55: #{tpu_custom_call.1} parent=1 // pred_check_branch
      %120 = sbr.rel (0) target = $region57
    $region56: #{tpu_custom_call.1} parent=1 // pred_region
      %121 = dma.done [#allocation9], 1024
    $region57: #{tpu_custom_call.1} parent=1 // pred_fallthru
      _
    // Predicated region
    $region58: #{tpu_custom_call.1} parent=1 // pred_check
      _
    $region59: #{tpu_custom_call.1} parent=1 // pred_check_branch
      %123 = sbr.rel (0) target = $region61
    $region60: #{tpu_custom_call.1} parent=1 // pred_region
      %124 = dma.done [#allocation12], 1024
    $region61: #{tpu_custom_call.1} parent=1 // pred_fallthru
      _
    // Predicated region
    $region62: #{tpu_custom_call.1} parent=1 // pred_check
      _
    $region63: #{tpu_custom_call.1} parent=1 // pred_check_branch
      %126 = sbr.rel (0) target = $region65
    $region64: #{tpu_custom_call.1} parent=1 // pred_region
      %127 = dma.done [#allocation12], 1024
    $region65: #{tpu_custom_call.1} parent=1 // pred_fallthru
      _
    %v129 = vld [vmem:[#allocation2] sm:$0xff]
    %v130 = vld [vmem:[#allocation2 + $0x8] sm:$0xff]
    %v131 = vld [vmem:[#allocation2 + $0x10] sm:$0xff]
    %v132 = vld [vmem:[#allocation2 + $0x18] sm:$0xff]
    %v133 = vld [vmem:[#allocation2 + $0x20] sm:$0xff]
    %v134 = vld [vmem:[#allocation2 + $0x28] sm:$0xff]
    %v135 = vld [vmem:[#allocation2 + $0x30] sm:$0xff]
    %v136 = vld [vmem:[#allocation2 + $0x38] sm:$0xff]
    %v137 = vld [vmem:[#allocation5] sm:$0xf]
    %v138 = vld [vmem:[#allocation5 + $0x4] sm:$0xf]
    %v139 = vld [vmem:[#allocation5 + $0x8] sm:$0xf]
    %v140 = vld [vmem:[#allocation5 + $0xc] sm:$0xf]
    %v141 = vld [vmem:[#allocation5 + $0x10] sm:$0xf]
    %v142 = vld [vmem:[#allocation5 + $0x14] sm:$0xf]
    %v143 = vld [vmem:[#allocation5 + $0x18] sm:$0xf]
    %v144 = vld [vmem:[#allocation5 + $0x1c] sm:$0xf]
    %v145 = vld [vmem:[#allocation5 + $0x20] sm:$0xf]
    %v146 = vld [vmem:[#allocation5 + $0x24] sm:$0xf]
    %v147 = vld [vmem:[#allocation5 + $0x28] sm:$0xf]
    %v148 = vld [vmem:[#allocation5 + $0x2c] sm:$0xf]
    %v149 = vld [vmem:[#allocation5 + $0x30] sm:$0xf]
    %v150 = vld [vmem:[#allocation5 + $0x34] sm:$0xf]
    %v151 = vld [vmem:[#allocation5 + $0x38] sm:$0xf]
    %v152 = vld [vmem:[#allocation5 + $0x3c] sm:$0xf]
    %v153 = vld [vmem:[#allocation5 + $0x40] sm:$0xf]
    %v154 = vld [vmem:[#allocation5 + $0x44] sm:$0xf]
    %v155 = vld [vmem:[#allocation5 + $0x48] sm:$0xf]
    %v156 = vld [vmem:[#allocation5 + $0x4c] sm:$0xf]
    %v157 = vld [vmem:[#allocation5 + $0x50] sm:$0xf]
    %v158 = vld [vmem:[#allocation5 + $0x54] sm:$0xf]
    %v159 = vld [vmem:[#allocation5 + $0x58] sm:$0xf]
    %v160 = vld [vmem:[#allocation5 + $0x5c] sm:$0xf]
    %v161 = vld [vmem:[#allocation5 + $0x60] sm:$0xf]
    %v162 = vld [vmem:[#allocation5 + $0x64] sm:$0xf]
    %v163 = vld [vmem:[#allocation5 + $0x68] sm:$0xf]
    %v164 = vld [vmem:[#allocation5 + $0x6c] sm:$0xf]
    %v165 = vld [vmem:[#allocation5 + $0x70] sm:$0xf]
    %v166 = vld [vmem:[#allocation5 + $0x74] sm:$0xf]
    %v167 = vld [vmem:[#allocation5 + $0x78] sm:$0xf]
    %v168 = vld [vmem:[#allocation5 + $0x7c] sm:$0xf]
    %v169 = vld [vmem:[#allocation5 + $0x80] sm:$0xf]
    %v170 = vld [vmem:[#allocation5 + $0x84] sm:$0xf]
    %v171 = vld [vmem:[#allocation5 + $0x88] sm:$0xf]
    %v172 = vld [vmem:[#allocation5 + $0x8c] sm:$0xf]
    %v173 = vld [vmem:[#allocation5 + $0x90] sm:$0xf]
    %v174 = vld [vmem:[#allocation5 + $0x94] sm:$0xf]
    %v175 = vld [vmem:[#allocation5 + $0x98] sm:$0xf]
    %v176 = vld [vmem:[#allocation5 + $0x9c] sm:$0xf]
    %v177 = vld [vmem:[#allocation5 + $0xa0] sm:$0xf]
    %v178 = vld [vmem:[#allocation5 + $0xa4] sm:$0xf]
    %v179 = vld [vmem:[#allocation5 + $0xa8] sm:$0xf]
    %v180 = vld [vmem:[#allocation5 + $0xac] sm:$0xf]
    %v181 = vld [vmem:[#allocation5 + $0xb0] sm:$0xf]
    %v182 = vld [vmem:[#allocation5 + $0xb4] sm:$0xf]
    %v183 = vld [vmem:[#allocation5 + $0xb8] sm:$0xf]
    %v184 = vld [vmem:[#allocation5 + $0xbc] sm:$0xf]
    %v185 = vld [vmem:[#allocation5 + $0xc0] sm:$0xf]
    %v186 = vld [vmem:[#allocation5 + $0xc4] sm:$0xf]
    %v187 = vld [vmem:[#allocation5 + $0xc8] sm:$0xf]
    %v188 = vld [vmem:[#allocation5 + $0xcc] sm:$0xf]
    %v189 = vld [vmem:[#allocation5 + $0xd0] sm:$0xf]
    %v190 = vld [vmem:[#allocation5 + $0xd4] sm:$0xf]
    %v191 = vld [vmem:[#allocation5 + $0xd8] sm:$0xf]
    %v192 = vld [vmem:[#allocation5 + $0xdc] sm:$0xf]
    %v193 = vld [vmem:[#allocation5 + $0xe0] sm:$0xf]
    %v194 = vld [vmem:[#allocation5 + $0xe4] sm:$0xf]
    %v195 = vld [vmem:[#allocation5 + $0xe8] sm:$0xf]
    %v196 = vld [vmem:[#allocation5 + $0xec] sm:$0xf]
    %v197 = vld [vmem:[#allocation5 + $0xf0] sm:$0xf]
    %v198 = vld [vmem:[#allocation5 + $0xf4] sm:$0xf]
    %v199 = vld [vmem:[#allocation5 + $0xf8] sm:$0xf]
    %v200 = vld [vmem:[#allocation5 + $0xfc] sm:$0xf]
    %v201 = vld [vmem:[#allocation5 + $0x100] sm:$0xf]
    %v202 = vld [vmem:[#allocation5 + $0x104] sm:$0xf]
    %v203 = vld [vmem:[#allocation5 + $0x108] sm:$0xf]
    %v204 = vld [vmem:[#allocation5 + $0x10c] sm:$0xf]
    %v205 = vld [vmem:[#allocation5 + $0x110] sm:$0xf]
    %v206 = vld [vmem:[#allocation5 + $0x114] sm:$0xf]
    %v207 = vld [vmem:[#allocation5 + $0x118] sm:$0xf]
    %v208 = vld [vmem:[#allocation5 + $0x11c] sm:$0xf]
    %v209 = vld [vmem:[#allocation5 + $0x120] sm:$0xf]
    %v210 = vld [vmem:[#allocation5 + $0x124] sm:$0xf]
    %v211 = vld [vmem:[#allocation5 + $0x128] sm:$0xf]
    %v212 = vld [vmem:[#allocation5 + $0x12c] sm:$0xf]
    %v213 = vld [vmem:[#allocation5 + $0x130] sm:$0xf]
    %v214 = vld [vmem:[#allocation5 + $0x134] sm:$0xf]
    %v215 = vld [vmem:[#allocation5 + $0x138] sm:$0xf]
    %v216 = vld [vmem:[#allocation5 + $0x13c] sm:$0xf]
    %v217 = vld [vmem:[#allocation5 + $0x140] sm:$0xf]
    %v218 = vld [vmem:[#allocation5 + $0x144] sm:$0xf]
    %v219 = vld [vmem:[#allocation5 + $0x148] sm:$0xf]
    %v220 = vld [vmem:[#allocation5 + $0x14c] sm:$0xf]
    %v221 = vld [vmem:[#allocation5 + $0x150] sm:$0xf]
    %v222 = vld [vmem:[#allocation5 + $0x154] sm:$0xf]
    %v223 = vld [vmem:[#allocation5 + $0x158] sm:$0xf]
    %v224 = vld [vmem:[#allocation5 + $0x15c] sm:$0xf]
    %v225 = vld [vmem:[#allocation5 + $0x160] sm:$0xf]
    %v226 = vld [vmem:[#allocation5 + $0x164] sm:$0xf]
    %v227 = vld [vmem:[#allocation5 + $0x168] sm:$0xf]
    %v228 = vld [vmem:[#allocation5 + $0x16c] sm:$0xf]
    %v229 = vld [vmem:[#allocation5 + $0x170] sm:$0xf]
    %v230 = vld [vmem:[#allocation5 + $0x174] sm:$0xf]
    %v231 = vld [vmem:[#allocation5 + $0x178] sm:$0xf]
    %v232 = vld [vmem:[#allocation5 + $0x17c] sm:$0xf]
    %v233 = vld [vmem:[#allocation5 + $0x180] sm:$0xf]
    %v234 = vld [vmem:[#allocation5 + $0x184] sm:$0xf]
    %v235 = vld [vmem:[#allocation5 + $0x188] sm:$0xf]
    %v236 = vld [vmem:[#allocation5 + $0x18c] sm:$0xf]
    %v237 = vld [vmem:[#allocation5 + $0x190] sm:$0xf]
    %v238 = vld [vmem:[#allocation5 + $0x194] sm:$0xf]
    %v239 = vld [vmem:[#allocation5 + $0x198] sm:$0xf]
    %v240 = vld [vmem:[#allocation5 + $0x19c] sm:$0xf]
    %v241 = vld [vmem:[#allocation5 + $0x1a0] sm:$0xf]
    %v242 = vld [vmem:[#allocation5 + $0x1a4] sm:$0xf]
    %v243 = vld [vmem:[#allocation5 + $0x1a8] sm:$0xf]
    %v244 = vld [vmem:[#allocation5 + $0x1ac] sm:$0xf]
    %v245 = vld [vmem:[#allocation5 + $0x1b0] sm:$0xf]
    %v246 = vld [vmem:[#allocation5 + $0x1b4] sm:$0xf]
    %v247 = vld [vmem:[#allocation5 + $0x1b8] sm:$0xf]
    %v248 = vld [vmem:[#allocation5 + $0x1bc] sm:$0xf]
    %v249 = vld [vmem:[#allocation5 + $0x1c0] sm:$0xf]
    %v250 = vld [vmem:[#allocation5 + $0x1c4] sm:$0xf]
    %v251 = vld [vmem:[#allocation5 + $0x1c8] sm:$0xf]
    %v252 = vld [vmem:[#allocation5 + $0x1cc] sm:$0xf]
    %v253 = vld [vmem:[#allocation5 + $0x1d0] sm:$0xf]
    %v254 = vld [vmem:[#allocation5 + $0x1d4] sm:$0xf]
    %v255 = vld [vmem:[#allocation5 + $0x1d8] sm:$0xf]
    %v256 = vld [vmem:[#allocation5 + $0x1dc] sm:$0xf]
    %v257 = vld [vmem:[#allocation5 + $0x1e0] sm:$0xf]
    %v258 = vld [vmem:[#allocation5 + $0x1e4] sm:$0xf]
    %v259 = vld [vmem:[#allocation5 + $0x1e8] sm:$0xf]
    %v260 = vld [vmem:[#allocation5 + $0x1ec] sm:$0xf]
    %v261 = vld [vmem:[#allocation5 + $0x1f0] sm:$0xf]
    %v262 = vld [vmem:[#allocation5 + $0x1f4] sm:$0xf]
    %v263 = vld [vmem:[#allocation5 + $0x1f8] sm:$0xf]
    %v264 = vld [vmem:[#allocation5 + $0x1fc] sm:$0xf]
    %v273 = vunpack.c.l.b16 %v129
    %v274 = vunpack.c.h.b16 %v129
    %v275 = vunpack.c.l.b16 %v130
    %v276 = vunpack.c.h.b16 %v130
    %v277 = vunpack.c.l.b16 %v131
    %v278 = vunpack.c.h.b16 %v131
    %v279 = vunpack.c.l.b16 %v132
    %v280 = vunpack.c.h.b16 %v132
    %v281 = vunpack.c.l.b16 %v133
    %v282 = vunpack.c.h.b16 %v133
    %v283 = vunpack.c.l.b16 %v134
    %v284 = vunpack.c.h.b16 %v134
    %v285 = vunpack.c.l.b16 %v135
    %v286 = vunpack.c.h.b16 %v135
    %v287 = vunpack.c.l.b16 %v136
    %v288 = vunpack.c.h.b16 %v136
    %v289 = vpack.c.b16 %v281, %v273
    %v290 = vpack.c.b16 %v282, %v274
    %v291 = vpack.c.b16 %v283, %v275
    %v292 = vpack.c.b16 %v284, %v276
    %v293 = vpack.c.b16 %v285, %v277
    %v294 = vpack.c.b16 %v286, %v278
    %v295 = vpack.c.b16 %v287, %v279
    %v296 = vpack.c.b16 %v288, %v280
    %v433 = vunpack.c.l.b16 %v137
    %v434 = vunpack.c.l.b16 %v138
    %v435 = vunpack.c.l.b16 %v139
    %v436 = vunpack.c.l.b16 %v140
    %v437 = vunpack.c.l.b16 %v141
    %v438 = vunpack.c.l.b16 %v142
    %v439 = vunpack.c.l.b16 %v143
    %v440 = vunpack.c.l.b16 %v144
    %v441 = vunpack.c.l.b16 %v145
    %v442 = vunpack.c.l.b16 %v146
    %v443 = vunpack.c.l.b16 %v147
    %v444 = vunpack.c.l.b16 %v148
    %v445 = vunpack.c.l.b16 %v149
    %v446 = vunpack.c.l.b16 %v150
    %v447 = vunpack.c.l.b16 %v151
    %v448 = vunpack.c.l.b16 %v152
    %v449 = vunpack.c.l.b16 %v153
    %v450 = vunpack.c.l.b16 %v154
    %v451 = vunpack.c.l.b16 %v155
    %v452 = vunpack.c.l.b16 %v156
    %v453 = vunpack.c.l.b16 %v157
    %v454 = vunpack.c.l.b16 %v158
    %v455 = vunpack.c.l.b16 %v159
    %v456 = vunpack.c.l.b16 %v160
    %v457 = vunpack.c.l.b16 %v161
    %v458 = vunpack.c.l.b16 %v162
    %v459 = vunpack.c.l.b16 %v163
    %v460 = vunpack.c.l.b16 %v164
    %v461 = vunpack.c.l.b16 %v165
    %v462 = vunpack.c.l.b16 %v166
    %v463 = vunpack.c.l.b16 %v167
    %v464 = vunpack.c.l.b16 %v168
    %v465 = vunpack.c.l.b16 %v169
    %v466 = vunpack.c.l.b16 %v170
    %v467 = vunpack.c.l.b16 %v171
    %v468 = vunpack.c.l.b16 %v172
    %v469 = vunpack.c.l.b16 %v173
    %v470 = vunpack.c.l.b16 %v174
    %v471 = vunpack.c.l.b16 %v175
    %v472 = vunpack.c.l.b16 %v176
    %v473 = vunpack.c.l.b16 %v177
    %v474 = vunpack.c.l.b16 %v178
    %v475 = vunpack.c.l.b16 %v179
    %v476 = vunpack.c.l.b16 %v180
    %v477 = vunpack.c.l.b16 %v181
    %v478 = vunpack.c.l.b16 %v182
    %v479 = vunpack.c.l.b16 %v183
    %v480 = vunpack.c.l.b16 %v184
    %v481 = vunpack.c.l.b16 %v185
    %v482 = vunpack.c.l.b16 %v186
    %v483 = vunpack.c.l.b16 %v187
    %v484 = vunpack.c.l.b16 %v188
    %v485 = vunpack.c.l.b16 %v189
    %v486 = vunpack.c.l.b16 %v190
    %v487 = vunpack.c.l.b16 %v191
    %v488 = vunpack.c.l.b16 %v192
    %v489 = vunpack.c.l.b16 %v193
    %v490 = vunpack.c.l.b16 %v194
    %v491 = vunpack.c.l.b16 %v195
    %v492 = vunpack.c.l.b16 %v196
    %v493 = vunpack.c.l.b16 %v197
    %v494 = vunpack.c.l.b16 %v198
    %v495 = vunpack.c.l.b16 %v199
    %v496 = vunpack.c.l.b16 %v200
    %v497 = vunpack.c.l.b16 %v201
    %v498 = vunpack.c.l.b16 %v202
    %v499 = vunpack.c.l.b16 %v203
    %v500 = vunpack.c.l.b16 %v204
    %v501 = vunpack.c.l.b16 %v205
    %v502 = vunpack.c.l.b16 %v206
    %v503 = vunpack.c.l.b16 %v207
    %v504 = vunpack.c.l.b16 %v208
    %v505 = vunpack.c.l.b16 %v209
    %v506 = vunpack.c.l.b16 %v210
    %v507 = vunpack.c.l.b16 %v211
    %v508 = vunpack.c.l.b16 %v212
    %v509 = vunpack.c.l.b16 %v213
    %v510 = vunpack.c.l.b16 %v214
    %v511 = vunpack.c.l.b16 %v215
    %v512 = vunpack.c.l.b16 %v216
    %v513 = vunpack.c.l.b16 %v217
    %v514 = vunpack.c.l.b16 %v218
    %v515 = vunpack.c.l.b16 %v219
    %v516 = vunpack.c.l.b16 %v220
    %v517 = vunpack.c.l.b16 %v221
    %v518 = vunpack.c.l.b16 %v222
    %v519 = vunpack.c.l.b16 %v223
    %v520 = vunpack.c.l.b16 %v224
    %v521 = vunpack.c.l.b16 %v225
    %v522 = vunpack.c.l.b16 %v226
    %v523 = vunpack.c.l.b16 %v227
    %v524 = vunpack.c.l.b16 %v228
    %v525 = vunpack.c.l.b16 %v229
    %v526 = vunpack.c.l.b16 %v230
    %v527 = vunpack.c.l.b16 %v231
    %v528 = vunpack.c.l.b16 %v232
    %v529 = vunpack.c.l.b16 %v233
    %v530 = vunpack.c.l.b16 %v234
    %v531 = vunpack.c.l.b16 %v235
    %v532 = vunpack.c.l.b16 %v236
    %v533 = vunpack.c.l.b16 %v237
    %v534 = vunpack.c.l.b16 %v238
    %v535 = vunpack.c.l.b16 %v239
    %v536 = vunpack.c.l.b16 %v240
    %v537 = vunpack.c.l.b16 %v241
    %v538 = vunpack.c.l.b16 %v242
    %v539 = vunpack.c.l.b16 %v243
    %v540 = vunpack.c.l.b16 %v244
    %v541 = vunpack.c.l.b16 %v245
    %v542 = vunpack.c.l.b16 %v246
    %v543 = vunpack.c.l.b16 %v247
    %v544 = vunpack.c.l.b16 %v248
    %v545 = vunpack.c.l.b16 %v249
    %v546 = vunpack.c.l.b16 %v250
    %v547 = vunpack.c.l.b16 %v251
    %v548 = vunpack.c.l.b16 %v252
    %v549 = vunpack.c.l.b16 %v253
    %v550 = vunpack.c.l.b16 %v254
    %v551 = vunpack.c.l.b16 %v255
    %v552 = vunpack.c.l.b16 %v256
    %v553 = vunpack.c.l.b16 %v257
    %v554 = vunpack.c.l.b16 %v258
    %v555 = vunpack.c.l.b16 %v259
    %v556 = vunpack.c.l.b16 %v260
    %v557 = vunpack.c.l.b16 %v261
    %v558 = vunpack.c.l.b16 %v262
    %v559 = vunpack.c.l.b16 %v263
    %v560 = vunpack.c.l.b16 %v264
    %v561 = vpack.c.b16 %v434, %v433
    %v562 = vpack.c.b16 %v436, %v435
    %v563 = vpack.c.b16 %v438, %v437
    %v564 = vpack.c.b16 %v440, %v439
    %v565 = vpack.c.b16 %v442, %v441
    %v566 = vpack.c.b16 %v444, %v443
    %v567 = vpack.c.b16 %v446, %v445
    %v568 = vpack.c.b16 %v448, %v447
    %v569 = vpack.c.b16 %v450, %v449
    %v570 = vpack.c.b16 %v452, %v451
    %v571 = vpack.c.b16 %v454, %v453
    %v572 = vpack.c.b16 %v456, %v455
    %v573 = vpack.c.b16 %v458, %v457
    %v574 = vpack.c.b16 %v460, %v459
    %v575 = vpack.c.b16 %v462, %v461
    %v576 = vpack.c.b16 %v464, %v463
    %v577 = vpack.c.b16 %v466, %v465
    %v578 = vpack.c.b16 %v468, %v467
    %v579 = vpack.c.b16 %v470, %v469
    %v580 = vpack.c.b16 %v472, %v471
    %v581 = vpack.c.b16 %v474, %v473
    %v582 = vpack.c.b16 %v476, %v475
    %v583 = vpack.c.b16 %v478, %v477
    %v584 = vpack.c.b16 %v480, %v479
    %v585 = vpack.c.b16 %v482, %v481
    %v586 = vpack.c.b16 %v484, %v483
    %v587 = vpack.c.b16 %v486, %v485
    %v588 = vpack.c.b16 %v488, %v487
    %v589 = vpack.c.b16 %v490, %v489
    %v590 = vpack.c.b16 %v492, %v491
    %v591 = vpack.c.b16 %v494, %v493
    %v592 = vpack.c.b16 %v496, %v495
    %v593 = vpack.c.b16 %v498, %v497
    %v594 = vpack.c.b16 %v500, %v499
    %v595 = vpack.c.b16 %v502, %v501
    %v596 = vpack.c.b16 %v504, %v503
    %v597 = vpack.c.b16 %v506, %v505
    %v598 = vpack.c.b16 %v508, %v507
    %v599 = vpack.c.b16 %v510, %v509
    %v600 = vpack.c.b16 %v512, %v511
    %v601 = vpack.c.b16 %v514, %v513
    %v602 = vpack.c.b16 %v516, %v515
    %v603 = vpack.c.b16 %v518, %v517
    %v604 = vpack.c.b16 %v520, %v519
    %v605 = vpack.c.b16 %v522, %v521
    %v606 = vpack.c.b16 %v524, %v523
    %v607 = vpack.c.b16 %v526, %v525
    %v608 = vpack.c.b16 %v528, %v527
    %v609 = vpack.c.b16 %v530, %v529
    %v610 = vpack.c.b16 %v532, %v531
    %v611 = vpack.c.b16 %v534, %v533
    %v612 = vpack.c.b16 %v536, %v535
    %v613 = vpack.c.b16 %v538, %v537
    %v614 = vpack.c.b16 %v540, %v539
    %v615 = vpack.c.b16 %v542, %v541
    %v616 = vpack.c.b16 %v544, %v543
    %v617 = vpack.c.b16 %v546, %v545
    %v618 = vpack.c.b16 %v548, %v547
    %v619 = vpack.c.b16 %v550, %v549
    %v620 = vpack.c.b16 %v552, %v551
    %v621 = vpack.c.b16 %v554, %v553
    %v622 = vpack.c.b16 %v556, %v555
    %v623 = vpack.c.b16 %v558, %v557
    %v624 = vpack.c.b16 %v560, %v559
    %689 = vmatprep.subr.bf16.mxu0 0
    %690 = vmatpush1.bf16.msra.mxu0 %v561
    %691 = vmatprep.subr.bf16.mxu0 0
    %692 = vmatpush1.bf16.msra.mxu0 %v562
    %693 = vmatprep.subr.bf16.mxu0 0
    %694 = vmatpush1.bf16.msra.mxu0 %v563
    %695 = vmatprep.subr.bf16.mxu0 0
    %696 = vmatpush1.bf16.msra.mxu0 %v564
    %697 = vmatprep.subr.bf16.mxu0 0
    %698 = vmatpush1.bf16.msra.mxu0 %v565
    %699 = vmatprep.subr.bf16.mxu0 0
    %700 = vmatpush1.bf16.msra.mxu0 %v566
    %701 = vmatprep.subr.bf16.mxu0 0
    %702 = vmatpush1.bf16.msra.mxu0 %v567
    %703 = vmatprep.subr.bf16.mxu0 0
    %704 = vmatpush1.bf16.msra.mxu0 %v568
    %705 = vmatprep.subr.bf16.mxu0 0
    %706 = vmatpush1.bf16.msra.mxu0 %v569
    %707 = vmatprep.subr.bf16.mxu0 0
    %708 = vmatpush1.bf16.msra.mxu0 %v570
    %709 = vmatprep.subr.bf16.mxu0 0
    %710 = vmatpush1.bf16.msra.mxu0 %v571
    %711 = vmatprep.subr.bf16.mxu0 0
    %712 = vmatpush1.bf16.msra.mxu0 %v572
    %713 = vmatprep.subr.bf16.mxu0 0
    %714 = vmatpush1.bf16.msra.mxu0 %v573
    %715 = vmatprep.subr.bf16.mxu0 0
    %716 = vmatpush1.bf16.msra.mxu0 %v574
    %717 = vmatprep.subr.bf16.mxu0 0
    %718 = vmatpush1.bf16.msra.mxu0 %v575
    %719 = vmatprep.subr.bf16.mxu0 0
    %720 = vmatpush1.bf16.msra.mxu0 %v576
    %721 = vmatprep.mubr.bf16.mxu0 %v290
    %722 = vmatmul.mubr.bf16.gmra.mrb[0].mxu0 %v289
    %v723 = vpop.f32.mrb[0].mxu0
    %v724 = vadd.f32 0.0, %v723
    %v725 = vpop.f32.mrb[0].mxu0
    %v726 = vpop.f32.mrb[0].mxu0
    %v727 = vadd.f32 0.0, %v726
    %v728 = vpop.f32.mrb[0].mxu0
    %729 = vdwg.mxu0
    %730 = vmatprep.subr.bf16.mxu0 0
    %731 = vmatpush1.bf16.msra.mxu0 %v577
    %732 = vmatprep.subr.bf16.mxu0 0
    %733 = vmatpush1.bf16.msra.mxu0 %v578
    %734 = vmatprep.subr.bf16.mxu0 0
    %735 = vmatpush1.bf16.msra.mxu0 %v579
    %736 = vmatprep.subr.bf16.mxu0 0
    %737 = vmatpush1.bf16.msra.mxu0 %v580
    %738 = vmatprep.subr.bf16.mxu0 0
    %739 = vmatpush1.bf16.msra.mxu0 %v581
    %740 = vmatprep.subr.bf16.mxu0 0
    %741 = vmatpush1.bf16.msra.mxu0 %v582
    %742 = vmatprep.subr.bf16.mxu0 0
    %743 = vmatpush1.bf16.msra.mxu0 %v583
    %744 = vmatprep.subr.bf16.mxu0 0
    %745 = vmatpush1.bf16.msra.mxu0 %v584
    %746 = vmatprep.subr.bf16.mxu0 0
    %747 = vmatpush1.bf16.msra.mxu0 %v585
    %748 = vmatprep.subr.bf16.mxu0 0
    %749 = vmatpush1.bf16.msra.mxu0 %v586
    %750 = vmatprep.subr.bf16.mxu0 0
    %751 = vmatpush1.bf16.msra.mxu0 %v587
    %752 = vmatprep.subr.bf16.mxu0 0
    %753 = vmatpush1.bf16.msra.mxu0 %v588
    %754 = vmatprep.subr.bf16.mxu0 0
    %755 = vmatpush1.bf16.msra.mxu0 %v589
    %756 = vmatprep.subr.bf16.mxu0 0
    %757 = vmatpush1.bf16.msra.mxu0 %v590
    %758 = vmatprep.subr.bf16.mxu0 0
    %759 = vmatpush1.bf16.msra.mxu0 %v591
    %760 = vmatprep.subr.bf16.mxu0 0
    %761 = vmatpush1.bf16.msra.mxu0 %v592
    %762 = vmatprep.mubr.bf16.mxu0 %v292
    %763 = vmatmul.mubr.bf16.gmra.mrb[0].mxu0 %v291
    %v764 = vpop.f32.mrb[0].mxu0
    %v765 = vadd.f32 %v724, %v764
    %v766 = vpop.f32.mrb[0].mxu0
    %v767 = vpop.f32.mrb[0].mxu0
    %v768 = vadd.f32 %v727, %v767
    %v769 = vpop.f32.mrb[0].mxu0
    %770 = vdwg.mxu0
    %771 = vmatprep.subr.bf16.mxu0 0
    %772 = vmatpush1.bf16.msra.mxu0 %v593
    %773 = vmatprep.subr.bf16.mxu0 0
    %774 = vmatpush1.bf16.msra.mxu0 %v594
    %775 = vmatprep.subr.bf16.mxu0 0
    %776 = vmatpush1.bf16.msra.mxu0 %v595
    %777 = vmatprep.subr.bf16.mxu0 0
    %778 = vmatpush1.bf16.msra.mxu0 %v596
    %779 = vmatprep.subr.bf16.mxu0 0
    %780 = vmatpush1.bf16.msra.mxu0 %v597
    %781 = vmatprep.subr.bf16.mxu0 0
    %782 = vmatpush1.bf16.msra.mxu0 %v598
    %783 = vmatprep.subr.bf16.mxu0 0
    %784 = vmatpush1.bf16.msra.mxu0 %v599
    %785 = vmatprep.subr.bf16.mxu0 0
    %786 = vmatpush1.bf16.msra.mxu0 %v600
    %787 = vmatprep.subr.bf16.mxu0 0
    %788 = vmatpush1.bf16.msra.mxu0 %v601
    %789 = vmatprep.subr.bf16.mxu0 0
    %790 = vmatpush1.bf16.msra.mxu0 %v602
    %791 = vmatprep.subr.bf16.mxu0 0
    %792 = vmatpush1.bf16.msra.mxu0 %v603
    %793 = vmatprep.subr.bf16.mxu0 0
    %794 = vmatpush1.bf16.msra.mxu0 %v604
    %795 = vmatprep.subr.bf16.mxu0 0
    %796 = vmatpush1.bf16.msra.mxu0 %v605
    %797 = vmatprep.subr.bf16.mxu0 0
    %798 = vmatpush1.bf16.msra.mxu0 %v606
    %799 = vmatprep.subr.bf16.mxu0 0
    %800 = vmatpush1.bf16.msra.mxu0 %v607
    %801 = vmatprep.subr.bf16.mxu0 0
    %802 = vmatpush1.bf16.msra.mxu0 %v608
    %803 = vmatprep.mubr.bf16.mxu0 %v294
    %804 = vmatmul.mubr.bf16.gmra.mrb[0].mxu0 %v293
    %v805 = vpop.f32.mrb[0].mxu0
    %v806 = vadd.f32 %v765, %v805
    %v807 = vpop.f32.mrb[0].mxu0
    %v808 = vpop.f32.mrb[0].mxu0
    %v809 = vadd.f32 %v768, %v808
    %v810 = vpop.f32.mrb[0].mxu0
    %811 = vdwg.mxu0
    %812 = vmatprep.subr.bf16.mxu0 0
    %813 = vmatpush1.bf16.msra.mxu0 %v609
    %814 = vmatprep.subr.bf16.mxu0 0
    %815 = vmatpush1.bf16.msra.mxu0 %v610
    %816 = vmatprep.subr.bf16.mxu0 0
    %817 = vmatpush1.bf16.msra.mxu0 %v611
    %818 = vmatprep.subr.bf16.mxu0 0
    %819 = vmatpush1.bf16.msra.mxu0 %v612
    %820 = vmatprep.subr.bf16.mxu0 0
    %821 = vmatpush1.bf16.msra.mxu0 %v613
    %822 = vmatprep.subr.bf16.mxu0 0
    %823 = vmatpush1.bf16.msra.mxu0 %v614
    %824 = vmatprep.subr.bf16.mxu0 0
    %825 = vmatpush1.bf16.msra.mxu0 %v615
    %826 = vmatprep.subr.bf16.mxu0 0
    %827 = vmatpush1.bf16.msra.mxu0 %v616
    %828 = vmatprep.subr.bf16.mxu0 0
    %829 = vmatpush1.bf16.msra.mxu0 %v617
    %830 = vmatprep.subr.bf16.mxu0 0
    %831 = vmatpush1.bf16.msra.mxu0 %v618
    %832 = vmatprep.subr.bf16.mxu0 0
    %833 = vmatpush1.bf16.msra.mxu0 %v619
    %834 = vmatprep.subr.bf16.mxu0 0
    %835 = vmatpush1.bf16.msra.mxu0 %v620
    %836 = vmatprep.subr.bf16.mxu0 0
    %837 = vmatpush1.bf16.msra.mxu0 %v621
    %838 = vmatprep.subr.bf16.mxu0 0
    %839 = vmatpush1.bf16.msra.mxu0 %v622
    %840 = vmatprep.subr.bf16.mxu0 0
    %841 = vmatpush1.bf16.msra.mxu0 %v623
    %842 = vmatprep.subr.bf16.mxu0 0
    %843 = vmatpush1.bf16.msra.mxu0 %v624
    %844 = vmatprep.mubr.bf16.mxu0 %v296
    %845 = vmatmul.mubr.bf16.gmra.mrb[0].mxu0 %v295
    %v846 = vpop.f32.mrb[0].mxu0
    %v847 = vadd.f32 %v806, %v846
    %v848 = vpop.f32.mrb[0].mxu0
    %v849 = vpop.f32.mrb[0].mxu0
    %v850 = vadd.f32 %v809, %v849
    %v851 = vpop.f32.mrb[0].mxu0
    %852 = vdwg.mxu0
    %v853 = vld [vmem:[#allocation7] sm:$0xf]
    %v854 = vld [vmem:[#allocation7 + $0x4] sm:$0xf]
    %v855 = vld [vmem:[#allocation8] sm:$0xf]
    %v856 = vld [vmem:[#allocation8 + $0x4] sm:$0xf]
    %v857 = vld [vmem:[#allocation8 + $0x8] sm:$0xf]
    %v858 = vld [vmem:[#allocation8 + $0xc] sm:$0xf]
    %v859 = vld [vmem:[#allocation8 + $0x10] sm:$0xf]
    %v860 = vld [vmem:[#allocation8 + $0x14] sm:$0xf]
    %v861 = vld [vmem:[#allocation8 + $0x18] sm:$0xf]
    %v862 = vld [vmem:[#allocation8 + $0x1c] sm:$0xf]
    %v863 = vld [vmem:[#allocation8 + $0x20] sm:$0xf]
    %v864 = vld [vmem:[#allocation8 + $0x24] sm:$0xf]
    %v865 = vld [vmem:[#allocation8 + $0x28] sm:$0xf]
    %v866 = vld [vmem:[#allocation8 + $0x2c] sm:$0xf]
    %v867 = vld [vmem:[#allocation8 + $0x30] sm:$0xf]
    %v868 = vld [vmem:[#allocation8 + $0x34] sm:$0xf]
    %v869 = vld [vmem:[#allocation8 + $0x38] sm:$0xf]
    %v870 = vld [vmem:[#allocation8 + $0x3c] sm:$0xf]
    %v873 = vunpack.c.l.b16 %v853
    %v874 = vunpack.c.l.b16 %v854
    %v875 = vpack.c.b16 %v874, %v873
    %v893 = vunpack.c.l.b16 %v855
    %v894 = vunpack.c.l.b16 %v856
    %v895 = vunpack.c.l.b16 %v857
    %v896 = vunpack.c.l.b16 %v858
    %v897 = vunpack.c.l.b16 %v859
    %v898 = vunpack.c.l.b16 %v860
    %v899 = vunpack.c.l.b16 %v861
    %v900 = vunpack.c.l.b16 %v862
    %v901 = vunpack.c.l.b16 %v863
    %v902 = vunpack.c.l.b16 %v864
    %v903 = vunpack.c.l.b16 %v865
    %v904 = vunpack.c.l.b16 %v866
    %v905 = vunpack.c.l.b16 %v867
    %v906 = vunpack.c.l.b16 %v868
    %v907 = vunpack.c.l.b16 %v869
    %v908 = vunpack.c.l.b16 %v870
    %v909 = vpack.c.b16 %v894, %v893
    %v910 = vpack.c.b16 %v896, %v895
    %v911 = vpack.c.b16 %v898, %v897
    %v912 = vpack.c.b16 %v900, %v899
    %v913 = vpack.c.b16 %v902, %v901
    %v914 = vpack.c.b16 %v904, %v903
    %v915 = vpack.c.b16 %v906, %v905
    %v916 = vpack.c.b16 %v908, %v907
    %925 = vmatprep.subr.bf16.mxu0 0
    %926 = vmatpush1.bf16.msra.mxu0 %v909
    %927 = vmatprep.subr.bf16.mxu0 0
    %928 = vmatpush1.bf16.msra.mxu0 %v910
    %929 = vmatprep.subr.bf16.mxu0 0
    %930 = vmatpush1.bf16.msra.mxu0 %v911
    %931 = vmatprep.subr.bf16.mxu0 0
    %932 = vmatpush1.bf16.msra.mxu0 %v912
    %933 = vmatprep.subr.bf16.mxu0 0
    %934 = vmatpush1.bf16.msra.mxu0 %v913
    %935 = vmatprep.subr.bf16.mxu0 0
    %936 = vmatpush1.bf16.msra.mxu0 %v914
    %937 = vmatprep.subr.bf16.mxu0 0
    %938 = vmatpush1.bf16.msra.mxu0 %v915
    %939 = vmatprep.subr.bf16.mxu0 0
    %940 = vmatpush1.bf16.msra.mxu0 %v916
    %941 = vmatprep.subr.bf16.mxu0 0
    %942 = vmatpush1.bf16.msra.mxu0 0
    %943 = vmatprep.subr.bf16.mxu0 0
    %944 = vmatpush1.bf16.msra.mxu0 0
    %945 = vmatprep.subr.bf16.mxu0 0
    %946 = vmatpush1.bf16.msra.mxu0 0
    %947 = vmatprep.subr.bf16.mxu0 0
    %948 = vmatpush1.bf16.msra.mxu0 0
    %949 = vmatprep.subr.bf16.mxu0 0
    %950 = vmatpush1.bf16.msra.mxu0 0
    %951 = vmatprep.subr.bf16.mxu0 0
    %952 = vmatpush1.bf16.msra.mxu0 0
    %953 = vmatprep.subr.bf16.mxu0 0
    %954 = vmatpush1.bf16.msra.mxu0 0
    %955 = vmatprep.subr.bf16.mxu0 0
    %956 = vmatpush1.bf16.msra.mxu0 0
    %957 = vmatprep.mubr.bf16.mxu0 0
    %958 = vmatmul.mubr.bf16.gmra.mrb[0].mxu0 %v875
    %v959 = vpop.f32.mrb[0].mxu0
    %v960 = vadd.f32 0.0, %v959
    %v961 = vpop.f32.mrb[0].mxu0
    %v962 = vpop.f32.mrb[0].mxu0
    %v963 = vadd.f32 0.0, %v962
    %v964 = vpop.f32.mrb[0].mxu0
    %965 = vdwg.mxu0
    %v966 = vpack.c.bf16 %v963, %v960
    %v967 = vld [vmem:[#allocation11] sm:$0xf]
    %v968 = vld [vmem:[#allocation11 + $0x4] sm:$0xf]
    %v969 = vld [vmem:[#allocation11 + $0x8] sm:$0xf]
    %v970 = vld [vmem:[#allocation11 + $0xc] sm:$0xf]
    %v971 = vld [vmem:[#allocation11 + $0x10] sm:$0xf]
    %v972 = vld [vmem:[#allocation11 + $0x14] sm:$0xf]
    %v973 = vld [vmem:[#allocation11 + $0x18] sm:$0xf]
    %v974 = vld [vmem:[#allocation11 + $0x1c] sm:$0xf]
    %v975 = vld [vmem:[#allocation11 + $0x20] sm:$0xf]
    %v976 = vld [vmem:[#allocation11 + $0x24] sm:$0xf]
    %v977 = vld [vmem:[#allocation11 + $0x28] sm:$0xf]
    %v978 = vld [vmem:[#allocation11 + $0x2c] sm:$0xf]
    %v979 = vld [vmem:[#allocation11 + $0x30] sm:$0xf]
    %v980 = vld [vmem:[#allocation11 + $0x34] sm:$0xf]
    %v981 = vld [vmem:[#allocation11 + $0x38] sm:$0xf]
    %v982 = vld [vmem:[#allocation11 + $0x3c] sm:$0xf]
    %v999 = vunpack.c.l.b16 %v967
    %v1000 = vunpack.c.l.b16 %v968
    %v1001 = vunpack.c.l.b16 %v969
    %v1002 = vunpack.c.l.b16 %v970
    %v1003 = vunpack.c.l.b16 %v971
    %v1004 = vunpack.c.l.b16 %v972
    %v1005 = vunpack.c.l.b16 %v973
    %v1006 = vunpack.c.l.b16 %v974
    %v1007 = vunpack.c.l.b16 %v975
    %v1008 = vunpack.c.l.b16 %v976
    %v1009 = vunpack.c.l.b16 %v977
    %v1010 = vunpack.c.l.b16 %v978
    %v1011 = vunpack.c.l.b16 %v979
    %v1012 = vunpack.c.l.b16 %v980
    %v1013 = vunpack.c.l.b16 %v981
    %v1014 = vunpack.c.l.b16 %v982
    %v1015 = vpack.c.b16 %v1000, %v999
    %v1016 = vpack.c.b16 %v1002, %v1001
    %v1017 = vpack.c.b16 %v1004, %v1003
    %v1018 = vpack.c.b16 %v1006, %v1005
    %v1019 = vpack.c.b16 %v1008, %v1007
    %v1020 = vpack.c.b16 %v1010, %v1009
    %v1021 = vpack.c.b16 %v1012, %v1011
    %v1022 = vpack.c.b16 %v1014, %v1013
    %1031 = vmatprep.subr.bf16.mxu0 0
    %1032 = vmatpush1.bf16.msra.mxu0 %v1015
    %1033 = vmatprep.subr.bf16.mxu0 0
    %1034 = vmatpush1.bf16.msra.mxu0 %v1016
    %1035 = vmatprep.subr.bf16.mxu0 0
    %1036 = vmatpush1.bf16.msra.mxu0 %v1017
    %1037 = vmatprep.subr.bf16.mxu0 0
    %1038 = vmatpush1.bf16.msra.mxu0 %v1018
    %1039 = vmatprep.subr.bf16.mxu0 0
    %1040 = vmatpush1.bf16.msra.mxu0 %v1019
    %1041 = vmatprep.subr.bf16.mxu0 0
    %1042 = vmatpush1.bf16.msra.mxu0 %v1020
    %1043 = vmatprep.subr.bf16.mxu0 0
    %1044 = vmatpush1.bf16.msra.mxu0 %v1021
    %1045 = vmatprep.subr.bf16.mxu0 0
    %1046 = vmatpush1.bf16.msra.mxu0 %v1022
    %1047 = vmatprep.subr.bf16.mxu0 0
    %1048 = vmatpush1.bf16.msra.mxu0 0
    %1049 = vmatprep.subr.bf16.mxu0 0
    %1050 = vmatpush1.bf16.msra.mxu0 0
    %1051 = vmatprep.subr.bf16.mxu0 0
    %1052 = vmatpush1.bf16.msra.mxu0 0
    %1053 = vmatprep.subr.bf16.mxu0 0
    %1054 = vmatpush1.bf16.msra.mxu0 0
    %1055 = vmatprep.subr.bf16.mxu0 0
    %1056 = vmatpush1.bf16.msra.mxu0 0
    %1057 = vmatprep.subr.bf16.mxu0 0
    %1058 = vmatpush1.bf16.msra.mxu0 0
    %1059 = vmatprep.subr.bf16.mxu0 0
    %1060 = vmatpush1.bf16.msra.mxu0 0
    %1061 = vmatprep.subr.bf16.mxu0 0
    %1062 = vmatpush1.bf16.msra.mxu0 0
    %1063 = vmatprep.mubr.bf16.mxu0 0
    %1064 = vmatmul.mubr.bf16.gmra.mrb[0].mxu0 %v966
    %v1065 = vpop.f32.mrb[0].mxu0
    %v1066 = vadd.f32 0.0, %v1065
    %v1067 = vpop.f32.mrb[0].mxu0
    %v1068 = vpop.f32.mrb[0].mxu0
    %v1069 = vadd.f32 0.0, %v1068
    %v1070 = vpop.f32.mrb[0].mxu0
    %1071 = vdwg.mxu0
    %v1072 = vpack.c.bf16 %v850, %v847
    %v1073 = vld [vmem:[#allocation10] sm:$0xf]
    %v1074 = vld [vmem:[#allocation10 + $0x4] sm:$0xf]
    %v1075 = vld [vmem:[#allocation10 + $0x8] sm:$0xf]
    %v1076 = vld [vmem:[#allocation10 + $0xc] sm:$0xf]
    %v1077 = vld [vmem:[#allocation10 + $0x10] sm:$0xf]
    %v1078 = vld [vmem:[#allocation10 + $0x14] sm:$0xf]
    %v1079 = vld [vmem:[#allocation10 + $0x18] sm:$0xf]
    %v1080 = vld [vmem:[#allocation10 + $0x1c] sm:$0xf]
    %v1081 = vld [vmem:[#allocation10 + $0x20] sm:$0xf]
    %v1082 = vld [vmem:[#allocation10 + $0x24] sm:$0xf]
    %v1083 = vld [vmem:[#allocation10 + $0x28] sm:$0xf]
    %v1084 = vld [vmem:[#allocation10 + $0x2c] sm:$0xf]
    %v1085 = vld [vmem:[#allocation10 + $0x30] sm:$0xf]
    %v1086 = vld [vmem:[#allocation10 + $0x34] sm:$0xf]
    %v1087 = vld [vmem:[#allocation10 + $0x38] sm:$0xf]
    %v1088 = vld [vmem:[#allocation10 + $0x3c] sm:$0xf]
    %v1105 = vunpack.c.l.b16 %v1073
    %v1106 = vunpack.c.l.b16 %v1074
    %v1107 = vunpack.c.l.b16 %v1075
    %v1108 = vunpack.c.l.b16 %v1076
    %v1109 = vunpack.c.l.b16 %v1077
    %v1110 = vunpack.c.l.b16 %v1078
    %v1111 = vunpack.c.l.b16 %v1079
    %v1112 = vunpack.c.l.b16 %v1080
    %v1113 = vunpack.c.l.b16 %v1081
    %v1114 = vunpack.c.l.b16 %v1082
    %v1115 = vunpack.c.l.b16 %v1083
    %v1116 = vunpack.c.l.b16 %v1084
    %v1117 = vunpack.c.l.b16 %v1085
    %v1118 = vunpack.c.l.b16 %v1086
    %v1119 = vunpack.c.l.b16 %v1087
    %v1120 = vunpack.c.l.b16 %v1088
    %v1121 = vpack.c.b16 %v1106, %v1105
    %v1122 = vpack.c.b16 %v1108, %v1107
    %v1123 = vpack.c.b16 %v1110, %v1109
    %v1124 = vpack.c.b16 %v1112, %v1111
    %v1125 = vpack.c.b16 %v1114, %v1113
    %v1126 = vpack.c.b16 %v1116, %v1115
    %v1127 = vpack.c.b16 %v1118, %v1117
    %v1128 = vpack.c.b16 %v1120, %v1119
    %1137 = vmatprep.subr.bf16.mxu0 0
    %1138 = vmatpush1.bf16.msra.mxu0 %v1121
    %1139 = vmatprep.subr.bf16.mxu0 0
    %1140 = vmatpush1.bf16.msra.mxu0 %v1122
    %1141 = vmatprep.subr.bf16.mxu0 0
    %1142 = vmatpush1.bf16.msra.mxu0 %v1123
    %1143 = vmatprep.subr.bf16.mxu0 0
    %1144 = vmatpush1.bf16.msra.mxu0 %v1124
    %1145 = vmatprep.subr.bf16.mxu0 0
    %1146 = vmatpush1.bf16.msra.mxu0 %v1125
    %1147 = vmatprep.subr.bf16.mxu0 0
    %1148 = vmatpush1.bf16.msra.mxu0 %v1126
    %1149 = vmatprep.subr.bf16.mxu0 0
    %1150 = vmatpush1.bf16.msra.mxu0 %v1127
    %1151 = vmatprep.subr.bf16.mxu0 0
    %1152 = vmatpush1.bf16.msra.mxu0 %v1128
    %1153 = vmatprep.subr.bf16.mxu0 0
    %1154 = vmatpush1.bf16.msra.mxu0 0
    %1155 = vmatprep.subr.bf16.mxu0 0
    %1156 = vmatpush1.bf16.msra.mxu0 0
    %1157 = vmatprep.subr.bf16.mxu0 0
    %1158 = vmatpush1.bf16.msra.mxu0 0
    %1159 = vmatprep.subr.bf16.mxu0 0
    %1160 = vmatpush1.bf16.msra.mxu0 0
    %1161 = vmatprep.subr.bf16.mxu0 0
    %1162 = vmatpush1.bf16.msra.mxu0 0
    %1163 = vmatprep.subr.bf16.mxu0 0
    %1164 = vmatpush1.bf16.msra.mxu0 0
    %1165 = vmatprep.subr.bf16.mxu0 0
    %1166 = vmatpush1.bf16.msra.mxu0 0
    %1167 = vmatprep.subr.bf16.mxu0 0
    %1168 = vmatpush1.bf16.msra.mxu0 0
    %1169 = vmatprep.mubr.bf16.mxu0 0
    %1170 = vmatmul.mubr.bf16.gmra.mrb[0].mxu0 %v1072
    %v1171 = vpop.f32.mrb[0].mxu0
    %v1172 = vadd.f32 %v1066, %v1171
    %v1173 = vpop.f32.mrb[0].mxu0
    %v1174 = vpop.f32.mrb[0].mxu0
    %v1175 = vadd.f32 %v1069, %v1174
    %v1176 = vpop.f32.mrb[0].mxu0
    %1177 = vdwg.mxu0
    %v1178 = vld [vmem:[%s6] sm:$0x1]
    %v1180 = vlaneseq
    %v1181 = vshrl.u32 %v1180, 7
    %v1182 = vsub.s32 0, %v1181
    %v1183 = vrot.slane %v1178, %v1182
    %v1185 = vadd.f32 %v1172, %v1183
    %v1186 = vadd.f32 %v1175, %v1183
    %v1187 = vmax.f32 %v1185, 0.0
    %v1188 = vmax.f32 %v1186, 0.0
    %v1189 = vpack.c.bf16 %v1188, %v1187
    %v1190 = vld [vmem:[#allocation13] sm:$0xf]
    %v1191 = vld [vmem:[#allocation13 + $0x4] sm:$0xf]
    %v1192 = vld [vmem:[#allocation13 + $0x8] sm:$0xf]
    %v1193 = vld [vmem:[#allocation13 + $0xc] sm:$0xf]
    %v1194 = vld [vmem:[#allocation13 + $0x10] sm:$0xf]
    %v1195 = vld [vmem:[#allocation13 + $0x14] sm:$0xf]
    %v1196 = vld [vmem:[#allocation13 + $0x18] sm:$0xf]
    %v1197 = vld [vmem:[#allocation13 + $0x1c] sm:$0xf]
    %v1198 = vld [vmem:[#allocation13 + $0x20] sm:$0xf]
    %v1199 = vld [vmem:[#allocation13 + $0x24] sm:$0xf]
    %v1200 = vld [vmem:[#allocation13 + $0x28] sm:$0xf]
    %v1201 = vld [vmem:[#allocation13 + $0x2c] sm:$0xf]
    %v1202 = vld [vmem:[#allocation13 + $0x30] sm:$0xf]
    %v1203 = vld [vmem:[#allocation13 + $0x34] sm:$0xf]
    %v1204 = vld [vmem:[#allocation13 + $0x38] sm:$0xf]
    %v1205 = vld [vmem:[#allocation13 + $0x3c] sm:$0xf]
    %v1206 = vld [vmem:[%s8] sm:$0x1]
    %v1208 = vlaneseq
    %v1209 = vshrl.u32 %v1208, 7
    %v1210 = vsub.s32 0, %v1209
    %v1211 = vrot.slane %v1206, %v1210
    %v1229 = vunpack.c.l.b16 %v1190
    %v1230 = vunpack.c.l.b16 %v1191
    %v1231 = vunpack.c.l.b16 %v1192
    %v1232 = vunpack.c.l.b16 %v1193
    %v1233 = vunpack.c.l.b16 %v1194
    %v1234 = vunpack.c.l.b16 %v1195
    %v1235 = vunpack.c.l.b16 %v1196
    %v1236 = vunpack.c.l.b16 %v1197
    %v1237 = vunpack.c.l.b16 %v1198
    %v1238 = vunpack.c.l.b16 %v1199
    %v1239 = vunpack.c.l.b16 %v1200
    %v1240 = vunpack.c.l.b16 %v1201
    %v1241 = vunpack.c.l.b16 %v1202
    %v1242 = vunpack.c.l.b16 %v1203
    %v1243 = vunpack.c.l.b16 %v1204
    %v1244 = vunpack.c.l.b16 %v1205
    %v1245 = vpack.c.b16 %v1230, %v1229
    %v1246 = vpack.c.b16 %v1232, %v1231
    %v1247 = vpack.c.b16 %v1234, %v1233
    %v1248 = vpack.c.b16 %v1236, %v1235
    %v1249 = vpack.c.b16 %v1238, %v1237
    %v1250 = vpack.c.b16 %v1240, %v1239
    %v1251 = vpack.c.b16 %v1242, %v1241
    %v1252 = vpack.c.b16 %v1244, %v1243
    %1261 = vmatprep.subr.bf16.mxu0 0
    %1262 = vmatpush1.bf16.msra.mxu0 %v1245
    %1263 = vmatprep.subr.bf16.mxu0 0
    %1264 = vmatpush1.bf16.msra.mxu0 %v1246
    %1265 = vmatprep.subr.bf16.mxu0 0
    %1266 = vmatpush1.bf16.msra.mxu0 %v1247
    %1267 = vmatprep.subr.bf16.mxu0 0
    %1268 = vmatpush1.bf16.msra.mxu0 %v1248
    %1269 = vmatprep.subr.bf16.mxu0 0
    %1270 = vmatpush1.bf16.msra.mxu0 %v1249
    %1271 = vmatprep.subr.bf16.mxu0 0
    %1272 = vmatpush1.bf16.msra.mxu0 %v1250
    %1273 = vmatprep.subr.bf16.mxu0 0
    %1274 = vmatpush1.bf16.msra.mxu0 %v1251
    %1275 = vmatprep.subr.bf16.mxu0 0
    %1276 = vmatpush1.bf16.msra.mxu0 %v1252
    %1277 = vmatprep.subr.bf16.mxu0 0
    %1278 = vmatpush1.bf16.msra.mxu0 0
    %1279 = vmatprep.subr.bf16.mxu0 0
    %1280 = vmatpush1.bf16.msra.mxu0 0
    %1281 = vmatprep.subr.bf16.mxu0 0
    %1282 = vmatpush1.bf16.msra.mxu0 0
    %1283 = vmatprep.subr.bf16.mxu0 0
    %1284 = vmatpush1.bf16.msra.mxu0 0
    %1285 = vmatprep.subr.bf16.mxu0 0
    %1286 = vmatpush1.bf16.msra.mxu0 0
    %1287 = vmatprep.subr.bf16.mxu0 0
    %1288 = vmatpush1.bf16.msra.mxu0 0
    %1289 = vmatprep.subr.bf16.mxu0 0
    %1290 = vmatpush1.bf16.msra.mxu0 0
    %1291 = vmatprep.subr.bf16.mxu0 0
    %1292 = vmatpush1.bf16.msra.mxu0 0
    %1293 = vmatprep.mubr.bf16.mxu0 0
    %1294 = vmatmul.mubr.bf16.gmra.mrb[0].mxu0 %v1189
    %v1295 = vpop.f32.mrb[0].mxu0
    %v1296 = vadd.f32 %v1211, %v1295
    %v1297 = vpop.f32.mrb[0].mxu0
    %v1298 = vpop.f32.mrb[0].mxu0
    %v1299 = vadd.f32 %v1211, %v1298
    %v1300 = vpop.f32.mrb[0].mxu0
    %1301 = vdwg.mxu0
    %1302 = vst [vmem:[#allocation14] sm:$0xff] %v1296
    %1303 = vst [vmem:[#allocation14 + $0x8] sm:$0xff] %v1299
    // Predicated region
    $region66: #{tpu_custom_call.1} parent=1 // pred_check
      _
    $region67: #{tpu_custom_call.1} parent=1 // pred_check_branch
      %1305 = sbr.rel (0) target = $region69
    $region68: #{tpu_custom_call.1} parent=1 // pred_region
      %s1307 = ssub.s32 256, 256
      %1308 = vsyncadd [#allocation4], %s1307
      %s1309 = sshll.u32 [#allocation14], 4
      %s1310 = int_to_ptr.vmem [resolvable:$true] %s1309
      %1315 = dma.vmem_to_hbm [thread:$0]  %s1310, 256, %s9, [#allocation4], 128, 128, 8
    $region69: #{tpu_custom_call.1} parent=1 // pred_fallthru
      _
    // Predicated region
    $region70: #{tpu_custom_call.1} parent=1 // pred_check
      _
    $region71: #{tpu_custom_call.1} parent=1 // pred_check_branch
      %1317 = sbr.rel (0) target = $region73
    $region72: #{tpu_custom_call.1} parent=1 // pred_region
      %1318 = dma.done [#allocation4], 256
    $region73: #{tpu_custom_call.1} parent=1 // pred_fallthru
      _
    %1319 = vsyncpa [#allocation3], 1
    %1320 = vsyncpa [#allocation6], 1
    %1321 = vsyncpa [#allocation9], 1
    %1322 = vsyncpa [#allocation12], 1
    %1323 = vsyncpa [#allocation4], 1

</llo_original>
